<compile_context>
chip_gen: v7x
topology: tpu7x:2x2x1
jax: 0.10.0
libtpu: 0.0.40
codegen_flags: <defaults>
</compile_context>

<pallas_src>
import jax
import jax.numpy as jnp
from jax.experimental import pallas as pl
from jax.experimental.pallas import tpu as pltpu

GCN_DIM = 256
BERT_DIM = 768
FP_DIM = 128
IN_DIM = GCN_DIM + BERT_DIM + FP_DIM   # 1152
OUT_DIM = 128


def _round_up(x, m):
    return ((x + m - 1) // m) * m


def _choose_batch_tile(B, max_tb=512, min_tiles=2):
    """Rows per grid step.

    * multiple of 8/16 (sublane legality for f32/bf16), capped at max_tb
    * big enough to amortize the ~0.35 us per-grid-step pipeline overhead
    * for large B, keep >= min_tiles grid steps so the "parallel" batch axis
      can be sharded across both v7x TensorCores (v5e/v6e unaffected)
    """
    if B <= 16:
        return _round_up(max(B, 1), 8)
    return max(16, min(max_tb, _round_up(pl.cdiv(B, min_tiles), 16)))


# ----------------------------------------------------------------------------
# Pallas kernel: fused concat + nn.Linear(1152, 128)
# ----------------------------------------------------------------------------
def fused_concat_fc_kernel(g_ref, s_ref, f_ref, w_ref, b_ref, o_ref):
    # Three accumulating MXU passes against static slices of the resident
    # weight (static ref slices are free).  Total K = 1152, identical MXU work
    # to a single concat'd dot, but no (TB, 1152) staging buffer and therefore
    # no extra VMEM store/load traffic.
    acc = jnp.dot(g_ref[...], w_ref[0:GCN_DIM, :],
                  preferred_element_type=jnp.float32)
    acc = acc + jnp.dot(s_ref[...], w_ref[GCN_DIM:GCN_DIM + BERT_DIM, :],
                        preferred_element_type=jnp.float32)
    acc = acc + jnp.dot(f_ref[...], w_ref[GCN_DIM + BERT_DIM:IN_DIM, :],
                        preferred_element_type=jnp.float32)
    o_ref[...] = (acc + b_ref[...]).astype(o_ref.dtype)


def fused_concat_fc(gcn_out, bert_out, fp_out, w_fc, b_fc):
    """out = concat([gcn_out, bert_out, fp_out], axis=1) @ w_fc + b_fc.

    w_fc: (1152, 128) stored as (in, out); b_fc: (128,).
    Operands bf16, accumulation and output f32.
    """
    B = gcn_out.shape[0]
    TB = _choose_batch_tile(B)
    num_tiles = pl.cdiv(B, TB)

    # Producers already emit bf16 -> these are no-ops for the activations.
    # The weight cast is 288 KiB, fetched once and held VMEM-resident.
    g = gcn_out.astype(jnp.bfloat16)
    s = bert_out.astype(jnp.bfloat16)
    f = fp_out.astype(jnp.bfloat16)
    w = w_fc.astype(jnp.bfloat16)                       # (1152, 128)
    bias = b_fc.reshape(1, OUT_DIM).astype(jnp.float32)

    act_spec = lambda d: pl.BlockSpec((TB, d), lambda i: (i, 0))
    resident = lambda shape: pl.BlockSpec(shape, lambda i: (0, 0))

    # No wrapper-side padding / slicing: a ragged last batch tile is handled
    # by Pallas (out-of-bounds rows of the output block are not written back).
    return pl.pallas_call(
        fused_concat_fc_kernel,
        out_shape=jax.ShapeDtypeStruct((B, OUT_DIM), jnp.float32),
        grid=(num_tiles,),
        in_specs=[
            act_spec(GCN_DIM),
            act_spec(BERT_DIM),
            act_spec(FP_DIM),
            resident((IN_DIM, OUT_DIM)),   # weight: fetched once, VMEM-resident
            resident((1, OUT_DIM)),        # bias
        ],
        out_specs=pl.BlockSpec((TB, OUT_DIM), lambda i: (i, 0)),
        compiler_params=pltpu.CompilerParams(
            dimension_semantics=("parallel",),   # v7x: tiles split across TCs
            vmem_limit_bytes=24 << 20,
        ),
    )(g, s, f, w, bias)


# ----------------------------------------------------------------------------
# Deterministic stand-in submodules (plain JAX glue, emit bf16 features so the
# cast fuses into their final op under jit — no standalone HBM cast pass)
# ----------------------------------------------------------------------------
def gcn_standin(params, x, edge_index):
    """x: (B, N_nodes, node_feat), edge_index: (2, E) shared across batch."""
    _, N, _ = x.shape
    src, dst = edge_index[0], edge_index[1]
    adj = jnp.zeros((N, N), jnp.float32).at[src, dst].set(1.0)
    adj = adj + jnp.eye(N, dtype=jnp.float32)
    adj = adj / jnp.sum(adj, axis=1, keepdims=True)
    h = jnp.einsum("ij,bjf->bif", adj, x)             # message passing
    h = jax.nn.relu(jnp.einsum("bif,fh->bih", h, params["w1"]))
    h = jnp.mean(h, axis=1)                           # graph pooling
    return (h @ params["w2"]).astype(jnp.bfloat16)    # (B, 256)


def bert_standin(params, smiles_tokens):
    """smiles_tokens: (B, seq) int32 token ids -> pooled (B, 768)."""
    emb = params["embedding"][smiles_tokens]          # (B, seq, 768)
    pooled = jnp.mean(emb, axis=1)
    return jnp.tanh(pooled @ params["w_pool"]).astype(jnp.bfloat16)


def fingerprint_nn_standin(params, fingerprints):
    """fingerprints: (B, fp_in) -> (B, 128)."""
    h = jax.nn.relu(fingerprints @ params["w1"])
    return (h @ params["w2"]).astype(jnp.bfloat16)    # (B, 128)


def combined_model_forward(params, graph_x, edge_index, smiles, fingerprints):
    gcn_out = gcn_standin(params["gcn"], graph_x, edge_index)
    smiles_out = bert_standin(params["bert"], smiles)
    fp_out = fingerprint_nn_standin(params["fp"], fingerprints)
    return fused_concat_fc(gcn_out, smiles_out, fp_out,
                           params["fc_w"], params["fc_b"])


# ----------------------------------------------------------------------------
# Parameter init + example run
# ----------------------------------------------------------------------------
def init_params(key, node_feat, fp_in, vocab, hidden_gcn=32, hidden_fp=64):
    ks = jax.random.split(key, 8)
    scale = 0.02
    return {
        "gcn": {
            "w1": scale * jax.random.normal(ks[0], (node_feat, hidden_gcn), jnp.float32),
            "w2": scale * jax.random.normal(ks[1], (hidden_gcn, GCN_DIM), jnp.float32),
        },
        "bert": {
            "embedding": scale * jax.random.normal(ks[2], (vocab, BERT_DIM), jnp.float32),
            "w_pool": scale * jax.random.normal(ks[3], (BERT_DIM, BERT_DIM), jnp.float32),
        },
        "fp": {
            "w1": scale * jax.random.normal(ks[4], (fp_in, hidden_fp), jnp.float32),
            "w2": scale * jax.random.normal(ks[5], (hidden_fp, FP_DIM), jnp.float32),
        },
        # nn.Linear(256 + 768 + 128, 128): stored as (in, out)
        "fc_w": scale * jax.random.normal(ks[6], (IN_DIM, OUT_DIM), jnp.float32),
        "fc_b": scale * jax.random.normal(ks[7], (OUT_DIM,), jnp.float32),
    }


if __name__ == "__main__":
    key = jax.random.PRNGKey(0)
    B, N_NODES, NODE_FEAT, FP_IN, SEQ, VOCAB = 8, 6, 16, 64, 8, 32

    k_params, k_x, k_fp, k_tok = jax.random.split(key, 4)
    params = init_params(k_params, NODE_FEAT, FP_IN, VOCAB)

    graph_x = jax.random.normal(k_x, (B, N_NODES, NODE_FEAT), jnp.float32)
    edge_index = jnp.array(
        [[0, 1, 2, 3, 4, 5, 0, 2],
         [1, 2, 3, 4, 5, 0, 3, 5]], dtype=jnp.int32)
    smiles = jax.random.randint(k_tok, (B, SEQ), 0, VOCAB, dtype=jnp.int32)
    fingerprints = jax.random.normal(k_fp, (B, FP_IN), jnp.float32)

    forward = jax.jit(combined_model_forward)
    out = forward(params, graph_x, edge_index, smiles, fingerprints)
    out = jax.block_until_ready(out)

    # Reference check of the fused kernel against plain-JAX concat + matmul
    # (same bf16-rounded operands, f32 accumulation).
    gcn_out = gcn_standin(params["gcn"], graph_x, edge_index)
    bert_out = bert_standin(params["bert"], smiles)
    fp_out = fingerprint_nn_standin(params["fp"], fingerprints)
    ref_in = jnp.concatenate([gcn_out, bert_out, fp_out], axis=1).astype(jnp.float32)
    ref_w = params["fc_w"].astype(jnp.bfloat16).astype(jnp.float32)
    ref = jnp.dot(ref_in, ref_w, precision=jax.lax.Precision.HIGHEST) + params["fc_b"]

    assert out.shape == (B, OUT_DIM)
    assert jnp.allclose(out, ref, atol=1e-3, rtol=1e-2)

    print("KERNEL_OK")
</pallas_src>

<mosaic_0001>
module attributes {stable_mosaic.version = 11 : i64} {
  func.func @fused_concat_fc_kernel(%arg0: i32, %arg1: memref<8x256xbf16, #tpu.memory_space<vmem>>, %arg2: memref<8x768xbf16, #tpu.memory_space<vmem>>, %arg3: memref<8x128xbf16, #tpu.memory_space<vmem>>, %arg4: memref<1152x128xbf16, #tpu.memory_space<vmem>>, %arg5: memref<1x128xf32, #tpu.memory_space<vmem>>, %arg6: memref<8x128xf32, #tpu.memory_space<vmem>>) attributes {dimension_semantics = [#tpu.dimension_semantics<parallel>], iteration_bounds = array<i64: 1>, scalar_prefetch = 0 : i64, scratch_operands = 0 : i64, tpu.core_type = #tpu.core_type<tc>, window_params = [{transform_indices = @transform_0, window_bounds = array<i64: 8, 256>}, {transform_indices = @transform_1, window_bounds = array<i64: 8, 768>}, {transform_indices = @transform_2, window_bounds = array<i64: 8, 128>}, {pipeline_mode = #tpu.pipeline_mode<synchronous>, transform_indices = @transform_3, window_bounds = array<i64: 1152, 128>}, {pipeline_mode = #tpu.pipeline_mode<synchronous>, transform_indices = @transform_4, window_bounds = array<i64: 1, 128>}, {transform_indices = @transform_5, window_bounds = array<i64: 8, 128>}]} {
    %c0 = arith.constant 0 : index
    %c0_0 = arith.constant 0 : index
    %0 = vector.load %arg1[%c0, %c0_0] : memref<8x256xbf16, #tpu.memory_space<vmem>>, vector<8x256xbf16>
    %c0_1 = arith.constant 0 : index
    %c0_2 = arith.constant 0 : index
    %1 = vector.load %arg4[%c0_1, %c0_2] : memref<1152x128xbf16, #tpu.memory_space<vmem>>, vector<256x128xbf16>
    %cst = arith.constant dense<0.000000e+00> : vector<8x128xf32>
    %2 = tpu.matmul %0, %1, %cst {dimension_numbers = #tpu.dot_dimension_numbers<[1], [0], [0], [1], [0, 0, 1, 1], [], []>} : vector<8x256xbf16>, vector<256x128xbf16>, vector<8x128xf32> -> vector<8x128xf32>
    %c0_3 = arith.constant 0 : index
    %c0_4 = arith.constant 0 : index
    %3 = vector.load %arg2[%c0_3, %c0_4] : memref<8x768xbf16, #tpu.memory_space<vmem>>, vector<8x768xbf16>
    %c256 = arith.constant 256 : index
    %c0_5 = arith.constant 0 : index
    %4 = vector.load %arg4[%c256, %c0_5] : memref<1152x128xbf16, #tpu.memory_space<vmem>>, vector<768x128xbf16>
    %cst_6 = arith.constant dense<0.000000e+00> : vector<8x128xf32>
    %5 = tpu.matmul %3, %4, %cst_6 {dimension_numbers = #tpu.dot_dimension_numbers<[1], [0], [0], [1], [0, 0, 1, 1], [], []>} : vector<8x768xbf16>, vector<768x128xbf16>, vector<8x128xf32> -> vector<8x128xf32>
    %6 = arith.addf %2, %5 : vector<8x128xf32>
    %c0_7 = arith.constant 0 : index
    %c0_8 = arith.constant 0 : index
    %7 = vector.load %arg3[%c0_7, %c0_8] : memref<8x128xbf16, #tpu.memory_space<vmem>>, vector<8x128xbf16>
    %c1024 = arith.constant 1024 : index
    %c0_9 = arith.constant 0 : index
    %8 = vector.load %arg4[%c1024, %c0_9] : memref<1152x128xbf16, #tpu.memory_space<vmem>>, vector<128x128xbf16>
    %cst_10 = arith.constant dense<0.000000e+00> : vector<8x128xf32>
    %9 = tpu.matmul %7, %8, %cst_10 {dimension_numbers = #tpu.dot_dimension_numbers<[1], [0], [0], [1], [0, 0, 1, 1], [], []>} : vector<8x128xbf16>, vector<128x128xbf16>, vector<8x128xf32> -> vector<8x128xf32>
    %10 = arith.addf %6, %9 : vector<8x128xf32>
    %c0_11 = arith.constant 0 : index
    %c0_12 = arith.constant 0 : index
    %11 = vector.load %arg5[%c0_11, %c0_12] : memref<1x128xf32, #tpu.memory_space<vmem>>, vector<1x128xf32>
    %12 = vector.broadcast %11 : vector<1x128xf32> to vector<8x128xf32>
    %13 = arith.addf %10, %12 : vector<8x128xf32>
    %c0_13 = arith.constant 0 : index
    %c0_14 = arith.constant 0 : index
    %14 = vector.load %arg6[%c0_13, %c0_14] : memref<8x128xf32, #tpu.memory_space<vmem>>, vector<8x128xf32>
    tpu.vector_store %arg6[%c0_13, %c0_14], %13 {strides = array<i32>} : memref<8x128xf32, #tpu.memory_space<vmem>>, vector<8x128xf32>,
    return
  }
  func.func @transform_0(%arg0: i32) -> (i32, i32) {
    %c0_i32 = arith.constant 0 : i32
    %c0_i32_0 = arith.constant 0 : i32
    return %arg0, %c0_i32 : i32, i32
  }
  func.func @transform_1(%arg0: i32) -> (i32, i32) {
    %c0_i32 = arith.constant 0 : i32
    %c0_i32_0 = arith.constant 0 : i32
    return %arg0, %c0_i32 : i32, i32
  }
  func.func @transform_2(%arg0: i32) -> (i32, i32) {
    %c0_i32 = arith.constant 0 : i32
    %c0_i32_0 = arith.constant 0 : i32
    return %arg0, %c0_i32 : i32, i32
  }
  func.func @transform_3(%arg0: i32) -> (i32, i32) {
    %c0_i32 = arith.constant 0 : i32
    %c0_i32_0 = arith.constant 0 : i32
    %c0_i32_1 = arith.constant 0 : i32
    return %c0_i32, %c0_i32_0 : i32, i32
  }
  func.func @transform_4(%arg0: i32) -> (i32, i32) {
    %c0_i32 = arith.constant 0 : i32
    %c0_i32_0 = arith.constant 0 : i32
    %c0_i32_1 = arith.constant 0 : i32
    return %c0_i32, %c0_i32_0 : i32, i32
  }
  func.func @transform_5(%arg0: i32) -> (i32, i32) {
    %c0_i32 = arith.constant 0 : i32
    %c0_i32_0 = arith.constant 0 : i32
    return %arg0, %c0_i32 : i32, i32
  }
}

</mosaic_0001>

<llo_original>
// kernel: combined_model_forward.1
$region0: #{combined_model_forward.1}
  #allocation0 [shape = 'u32[]', space=smem, size = 0x4, offset = 0x4, fixed_abs, tag = 'smem constant byte address 0x4 - core index']
  #allocation1 [shape = 'u32[144,128]{1,0:T(1,128)}', space=vmem, size = 0x12000, scoped, tag = 'internal scratch']
  %s0 = inlined_call_operand.vmem [shape: bf16[8,256], index: 0, kind: input, shape index: {}]
  %s1 = inlined_call_operand.vmem [shape: bf16[8,768], index: 1, kind: input, shape index: {}]
  %s2 = inlined_call_operand.vmem [shape: bf16[8,128], index: 2, kind: input, shape index: {}]
  %s3 = inlined_call_operand.vmem [shape: bf16[1152,128], index: 3, kind: input, shape index: {}]
  %s4 = inlined_call_operand.vmem [shape: f32[1,128], index: 4, kind: input, shape index: {}]
  %s5 = inlined_call_operand.hbm [shape: f32[8,128], index: 5, kind: output, shape index: {}]
  %s6 = sld [smem:[#allocation0]]
  $region30: #{combined_model_forward.1} parent=0
    _
  %s8 = ssub.s32 1, %s6
  %s9 = scalar_select 0, %s8, %s6
  $region1: #{combined_model_forward.1} parent=0
    #allocation2 [shape = 'u8[4096]{0}', space=vmem, size = 0x1000, scoped, tag = 'output window, operand 0, single buffered']
    #allocation3 [shape = 's32[1]{0}', space=sflag, size = 0x4, scoped, tag = 'scoped memory for combined_model_forward.1']
    %10 = vsyncpa [#allocation3], 0
    // Predicated region
    $region2: #{combined_model_forward.1} parent=1 // pred_check
      _
    $region3: #{combined_model_forward.1} parent=1 // pred_check_branch
      %12 = sbr.rel (0) target = $region5
    $region4: #{combined_model_forward.1} parent=1 // pred_region
      _
    $region5: #{combined_model_forward.1} parent=1 // pred_fallthru
      _
    // Predicated region
    $region6: #{combined_model_forward.1} parent=1 // pred_check
      _
    $region7: #{combined_model_forward.1} parent=1 // pred_check_branch
      %14 = sbr.rel (0) target = $region9
    $region8: #{combined_model_forward.1} parent=1 // pred_region
      _
    $region9: #{combined_model_forward.1} parent=1 // pred_fallthru
      _
    // Predicated region
    $region10: #{combined_model_forward.1} parent=1 // pred_check
      _
    $region11: #{combined_model_forward.1} parent=1 // pred_check_branch
      %16 = sbr.rel (0) target = $region13
    $region12: #{combined_model_forward.1} parent=1 // pred_region
      _
    $region13: #{combined_model_forward.1} parent=1 // pred_fallthru
      _
    // Predicated region
    $region14: #{combined_model_forward.1} parent=1 // pred_check
      _
    $region15: #{combined_model_forward.1} parent=1 // pred_check_branch
      %18 = sbr.rel (0) target = $region17
    $region16: #{combined_model_forward.1} parent=1 // pred_region
      _
    $region17: #{combined_model_forward.1} parent=1 // pred_fallthru
      _
    // Predicated region
    $region18: #{combined_model_forward.1} parent=1 // pred_check
      _
    $region19: #{combined_model_forward.1} parent=1 // pred_check_branch
      %20 = sbr.rel (0) target = $region21
    $region20: #{combined_model_forward.1} parent=1 // pred_region
      _
    $region21: #{combined_model_forward.1} parent=1 // pred_fallthru
      _
    %v22 = vld [vmem:[%s0] sm:$0xff]
    %v23 = vld [vmem:[%s3] sm:$0xf]
    %v24 = vld [vmem:[%s3 + $0x4] sm:$0xf]
    %v25 = vld [vmem:[%s3 + $0x8] sm:$0xf]
    %v26 = vld [vmem:[%s3 + $0xc] sm:$0xf]
    %v27 = vld [vmem:[%s3 + $0x10] sm:$0xf]
    %v28 = vld [vmem:[%s3 + $0x14] sm:$0xf]
    %v29 = vld [vmem:[%s3 + $0x18] sm:$0xf]
    %v30 = vld [vmem:[%s3 + $0x1c] sm:$0xf]
    %v31 = vld [vmem:[%s3 + $0x20] sm:$0xf]
    %v32 = vld [vmem:[%s3 + $0x24] sm:$0xf]
    %v33 = vld [vmem:[%s3 + $0x28] sm:$0xf]
    %v34 = vld [vmem:[%s3 + $0x2c] sm:$0xf]
    %v35 = vld [vmem:[%s3 + $0x30] sm:$0xf]
    %v36 = vld [vmem:[%s3 + $0x34] sm:$0xf]
    %v37 = vld [vmem:[%s3 + $0x38] sm:$0xf]
    %v38 = vld [vmem:[%s3 + $0x3c] sm:$0xf]
    %v39 = vld [vmem:[%s3 + $0x40] sm:$0xf]
    %v40 = vld [vmem:[%s3 + $0x44] sm:$0xf]
    %v41 = vld [vmem:[%s3 + $0x48] sm:$0xf]
    %v42 = vld [vmem:[%s3 + $0x4c] sm:$0xf]
    %v43 = vld [vmem:[%s3 + $0x50] sm:$0xf]
    %v44 = vld [vmem:[%s3 + $0x54] sm:$0xf]
    %v45 = vld [vmem:[%s3 + $0x58] sm:$0xf]
    %v46 = vld [vmem:[%s3 + $0x5c] sm:$0xf]
    %v47 = vld [vmem:[%s3 + $0x60] sm:$0xf]
    %v48 = vld [vmem:[%s3 + $0x64] sm:$0xf]
    %v49 = vld [vmem:[%s3 + $0x68] sm:$0xf]
    %v50 = vld [vmem:[%s3 + $0x6c] sm:$0xf]
    %v51 = vld [vmem:[%s3 + $0x70] sm:$0xf]
    %v52 = vld [vmem:[%s3 + $0x74] sm:$0xf]
    %v53 = vld [vmem:[%s3 + $0x78] sm:$0xf]
    %v54 = vld [vmem:[%s3 + $0x7c] sm:$0xf]
    %v55 = vld [vmem:[%s1] sm:$0xff]
    %v56 = vld [vmem:[%s1 + $0x8] sm:$0xff]
    %v57 = vld [vmem:[%s1 + $0x10] sm:$0xff]
    %v58 = vld [vmem:[%s3 + $0x80] sm:$0xf]
    %v59 = vld [vmem:[%s3 + $0x84] sm:$0xf]
    %v60 = vld [vmem:[%s3 + $0x88] sm:$0xf]
    %v61 = vld [vmem:[%s3 + $0x8c] sm:$0xf]
    %v62 = vld [vmem:[%s3 + $0x90] sm:$0xf]
    %v63 = vld [vmem:[%s3 + $0x94] sm:$0xf]
    %v64 = vld [vmem:[%s3 + $0x98] sm:$0xf]
    %v65 = vld [vmem:[%s3 + $0x9c] sm:$0xf]
    %v66 = vld [vmem:[%s3 + $0xa0] sm:$0xf]
    %v67 = vld [vmem:[%s3 + $0xa4] sm:$0xf]
    %v68 = vld [vmem:[%s3 + $0xa8] sm:$0xf]
    %v69 = vld [vmem:[%s3 + $0xac] sm:$0xf]
    %v70 = vld [vmem:[%s3 + $0xb0] sm:$0xf]
    %v71 = vld [vmem:[%s3 + $0xb4] sm:$0xf]
    %v72 = vld [vmem:[%s3 + $0xb8] sm:$0xf]
    %v73 = vld [vmem:[%s3 + $0xbc] sm:$0xf]
    %v74 = vld [vmem:[%s3 + $0xc0] sm:$0xf]
    %v75 = vld [vmem:[%s3 + $0xc4] sm:$0xf]
    %v76 = vld [vmem:[%s3 + $0xc8] sm:$0xf]
    %v77 = vld [vmem:[%s3 + $0xcc] sm:$0xf]
    %v78 = vld [vmem:[%s3 + $0xd0] sm:$0xf]
    %v79 = vld [vmem:[%s3 + $0xd4] sm:$0xf]
    %v80 = vld [vmem:[%s3 + $0xd8] sm:$0xf]
    %v81 = vld [vmem:[%s3 + $0xdc] sm:$0xf]
    %v82 = vld [vmem:[%s3 + $0xe0] sm:$0xf]
    %v83 = vld [vmem:[%s3 + $0xe4] sm:$0xf]
    %v84 = vld [vmem:[%s3 + $0xe8] sm:$0xf]
    %v85 = vld [vmem:[%s3 + $0xec] sm:$0xf]
    %v86 = vld [vmem:[%s3 + $0xf0] sm:$0xf]
    %v87 = vld [vmem:[%s3 + $0xf4] sm:$0xf]
    %v88 = vld [vmem:[%s3 + $0xf8] sm:$0xf]
    %v89 = vld [vmem:[%s3 + $0xfc] sm:$0xf]
    %v90 = vld [vmem:[%s3 + $0x100] sm:$0xf]
    %v91 = vld [vmem:[%s3 + $0x104] sm:$0xf]
    %v92 = vld [vmem:[%s3 + $0x108] sm:$0xf]
    %v93 = vld [vmem:[%s3 + $0x10c] sm:$0xf]
    %v94 = vld [vmem:[%s3 + $0x110] sm:$0xf]
    %v95 = vld [vmem:[%s3 + $0x114] sm:$0xf]
    %v96 = vld [vmem:[%s3 + $0x118] sm:$0xf]
    %v97 = vld [vmem:[%s3 + $0x11c] sm:$0xf]
    %v98 = vld [vmem:[%s3 + $0x120] sm:$0xf]
    %v99 = vld [vmem:[%s3 + $0x124] sm:$0xf]
    %v100 = vld [vmem:[%s3 + $0x128] sm:$0xf]
    %v101 = vld [vmem:[%s3 + $0x12c] sm:$0xf]
    %v102 = vld [vmem:[%s3 + $0x130] sm:$0xf]
    %v103 = vld [vmem:[%s3 + $0x134] sm:$0xf]
    %v104 = vld [vmem:[%s3 + $0x138] sm:$0xf]
    %v105 = vld [vmem:[%s3 + $0x13c] sm:$0xf]
    %v106 = vld [vmem:[%s3 + $0x140] sm:$0xf]
    %v107 = vld [vmem:[%s3 + $0x144] sm:$0xf]
    %v108 = vld [vmem:[%s3 + $0x148] sm:$0xf]
    %v109 = vld [vmem:[%s3 + $0x14c] sm:$0xf]
    %v110 = vld [vmem:[%s3 + $0x150] sm:$0xf]
    %v111 = vld [vmem:[%s3 + $0x154] sm:$0xf]
    %v112 = vld [vmem:[%s3 + $0x158] sm:$0xf]
    %v113 = vld [vmem:[%s3 + $0x15c] sm:$0xf]
    %v114 = vld [vmem:[%s3 + $0x160] sm:$0xf]
    %v115 = vld [vmem:[%s3 + $0x164] sm:$0xf]
    %v116 = vld [vmem:[%s3 + $0x168] sm:$0xf]
    %v117 = vld [vmem:[%s3 + $0x16c] sm:$0xf]
    %v118 = vld [vmem:[%s3 + $0x170] sm:$0xf]
    %v119 = vld [vmem:[%s3 + $0x174] sm:$0xf]
    %v120 = vld [vmem:[%s3 + $0x178] sm:$0xf]
    %v121 = vld [vmem:[%s3 + $0x17c] sm:$0xf]
    %v122 = vld [vmem:[%s3 + $0x180] sm:$0xf]
    %v123 = vld [vmem:[%s3 + $0x184] sm:$0xf]
    %v124 = vld [vmem:[%s3 + $0x188] sm:$0xf]
    %v125 = vld [vmem:[%s3 + $0x18c] sm:$0xf]
    %v126 = vld [vmem:[%s3 + $0x190] sm:$0xf]
    %v127 = vld [vmem:[%s3 + $0x194] sm:$0xf]
    %v128 = vld [vmem:[%s3 + $0x198] sm:$0xf]
    %v129 = vld [vmem:[%s3 + $0x19c] sm:$0xf]
    %v130 = vld [vmem:[%s3 + $0x1a0] sm:$0xf]
    %v131 = vld [vmem:[%s3 + $0x1a4] sm:$0xf]
    %v132 = vld [vmem:[%s3 + $0x1a8] sm:$0xf]
    %v133 = vld [vmem:[%s3 + $0x1ac] sm:$0xf]
    %v134 = vld [vmem:[%s3 + $0x1b0] sm:$0xf]
    %v135 = vld [vmem:[%s3 + $0x1b4] sm:$0xf]
    %v136 = vld [vmem:[%s3 + $0x1b8] sm:$0xf]
    %v137 = vld [vmem:[%s3 + $0x1bc] sm:$0xf]
    %v138 = vld [vmem:[%s3 + $0x1c0] sm:$0xf]
    %v139 = vld [vmem:[%s3 + $0x1c4] sm:$0xf]
    %v140 = vld [vmem:[%s3 + $0x1c8] sm:$0xf]
    %v141 = vld [vmem:[%s3 + $0x1cc] sm:$0xf]
    %v142 = vld [vmem:[%s3 + $0x1d0] sm:$0xf]
    %v143 = vld [vmem:[%s3 + $0x1d4] sm:$0xf]
    %v144 = vld [vmem:[%s3 + $0x1d8] sm:$0xf]
    %v145 = vld [vmem:[%s3 + $0x1dc] sm:$0xf]
    %v146 = vld [vmem:[%s3 + $0x1e0] sm:$0xf]
    %v147 = vld [vmem:[%s3 + $0x1e4] sm:$0xf]
    %v148 = vld [vmem:[%s3 + $0x1e8] sm:$0xf]
    %v149 = vld [vmem:[%s3 + $0x1ec] sm:$0xf]
    %v150 = vld [vmem:[%s3 + $0x1f0] sm:$0xf]
    %v151 = vld [vmem:[%s3 + $0x1f4] sm:$0xf]
    %v152 = vld [vmem:[%s3 + $0x1f8] sm:$0xf]
    %v153 = vld [vmem:[%s3 + $0x1fc] sm:$0xf]
    %v157 = vunpack.c.l.b16 %v55
    %v158 = vunpack.c.h.b16 %v55
    %v159 = vunpack.c.l.b16 %v56
    %v160 = vunpack.c.h.b16 %v56
    %v161 = vunpack.c.l.b16 %v57
    %v162 = vunpack.c.h.b16 %v57
    %v163 = vpack.c.b16 %v157, %v157
    %v164 = vpack.c.b16 %v158, %v158
    %v165 = vpack.c.b16 %v159, %v159
    %v166 = vpack.c.b16 %v160, %v160
    %v167 = vpack.c.b16 %v161, %v161
    %v168 = vpack.c.b16 %v162, %v162
    %v271 = vunpack.c.l.b16 %v58
    %v272 = vunpack.c.l.b16 %v59
    %v273 = vunpack.c.l.b16 %v60
    %v274 = vunpack.c.l.b16 %v61
    %v275 = vunpack.c.l.b16 %v62
    %v276 = vunpack.c.l.b16 %v63
    %v277 = vunpack.c.l.b16 %v64
    %v278 = vunpack.c.l.b16 %v65
    %v279 = vunpack.c.l.b16 %v66
    %v280 = vunpack.c.l.b16 %v67
    %v281 = vunpack.c.l.b16 %v68
    %v282 = vunpack.c.l.b16 %v69
    %v283 = vunpack.c.l.b16 %v70
    %v284 = vunpack.c.l.b16 %v71
    %v285 = vunpack.c.l.b16 %v72
    %v286 = vunpack.c.l.b16 %v73
    %v287 = vunpack.c.l.b16 %v74
    %v288 = vunpack.c.l.b16 %v75
    %v289 = vunpack.c.l.b16 %v76
    %v290 = vunpack.c.l.b16 %v77
    %v291 = vunpack.c.l.b16 %v78
    %v292 = vunpack.c.l.b16 %v79
    %v293 = vunpack.c.l.b16 %v80
    %v294 = vunpack.c.l.b16 %v81
    %v295 = vunpack.c.l.b16 %v82
    %v296 = vunpack.c.l.b16 %v83
    %v297 = vunpack.c.l.b16 %v84
    %v298 = vunpack.c.l.b16 %v85
    %v299 = vunpack.c.l.b16 %v86
    %v300 = vunpack.c.l.b16 %v87
    %v301 = vunpack.c.l.b16 %v88
    %v302 = vunpack.c.l.b16 %v89
    %v303 = vunpack.c.l.b16 %v90
    %v304 = vunpack.c.l.b16 %v91
    %v305 = vunpack.c.l.b16 %v92
    %v306 = vunpack.c.l.b16 %v93
    %v307 = vunpack.c.l.b16 %v94
    %v308 = vunpack.c.l.b16 %v95
    %v309 = vunpack.c.l.b16 %v96
    %v310 = vunpack.c.l.b16 %v97
    %v311 = vunpack.c.l.b16 %v98
    %v312 = vunpack.c.l.b16 %v99
    %v313 = vunpack.c.l.b16 %v100
    %v314 = vunpack.c.l.b16 %v101
    %v315 = vunpack.c.l.b16 %v102
    %v316 = vunpack.c.l.b16 %v103
    %v317 = vunpack.c.l.b16 %v104
    %v318 = vunpack.c.l.b16 %v105
    %v319 = vunpack.c.l.b16 %v106
    %v320 = vunpack.c.l.b16 %v107
    %v321 = vunpack.c.l.b16 %v108
    %v322 = vunpack.c.l.b16 %v109
    %v323 = vunpack.c.l.b16 %v110
    %v324 = vunpack.c.l.b16 %v111
    %v325 = vunpack.c.l.b16 %v112
    %v326 = vunpack.c.l.b16 %v113
    %v327 = vunpack.c.l.b16 %v114
    %v328 = vunpack.c.l.b16 %v115
    %v329 = vunpack.c.l.b16 %v116
    %v330 = vunpack.c.l.b16 %v117
    %v331 = vunpack.c.l.b16 %v118
    %v332 = vunpack.c.l.b16 %v119
    %v333 = vunpack.c.l.b16 %v120
    %v334 = vunpack.c.l.b16 %v121
    %v335 = vunpack.c.l.b16 %v122
    %v336 = vunpack.c.l.b16 %v123
    %v337 = vunpack.c.l.b16 %v124
    %v338 = vunpack.c.l.b16 %v125
    %v339 = vunpack.c.l.b16 %v126
    %v340 = vunpack.c.l.b16 %v127
    %v341 = vunpack.c.l.b16 %v128
    %v342 = vunpack.c.l.b16 %v129
    %v343 = vunpack.c.l.b16 %v130
    %v344 = vunpack.c.l.b16 %v131
    %v345 = vunpack.c.l.b16 %v132
    %v346 = vunpack.c.l.b16 %v133
    %v347 = vunpack.c.l.b16 %v134
    %v348 = vunpack.c.l.b16 %v135
    %v349 = vunpack.c.l.b16 %v136
    %v350 = vunpack.c.l.b16 %v137
    %v351 = vunpack.c.l.b16 %v138
    %v352 = vunpack.c.l.b16 %v139
    %v353 = vunpack.c.l.b16 %v140
    %v354 = vunpack.c.l.b16 %v141
    %v355 = vunpack.c.l.b16 %v142
    %v356 = vunpack.c.l.b16 %v143
    %v357 = vunpack.c.l.b16 %v144
    %v358 = vunpack.c.l.b16 %v145
    %v359 = vunpack.c.l.b16 %v146
    %v360 = vunpack.c.l.b16 %v147
    %v361 = vunpack.c.l.b16 %v148
    %v362 = vunpack.c.l.b16 %v149
    %v363 = vunpack.c.l.b16 %v150
    %v364 = vunpack.c.l.b16 %v151
    %v365 = vunpack.c.l.b16 %v152
    %v366 = vunpack.c.l.b16 %v153
    %v367 = vpack.c.b16 %v272, %v271
    %v368 = vpack.c.b16 %v274, %v273
    %v369 = vpack.c.b16 %v276, %v275
    %v370 = vpack.c.b16 %v278, %v277
    %v371 = vpack.c.b16 %v280, %v279
    %v372 = vpack.c.b16 %v282, %v281
    %v373 = vpack.c.b16 %v284, %v283
    %v374 = vpack.c.b16 %v286, %v285
    %v375 = vpack.c.b16 %v288, %v287
    %v376 = vpack.c.b16 %v290, %v289
    %v377 = vpack.c.b16 %v292, %v291
    %v378 = vpack.c.b16 %v294, %v293
    %v379 = vpack.c.b16 %v296, %v295
    %v380 = vpack.c.b16 %v298, %v297
    %v381 = vpack.c.b16 %v300, %v299
    %v382 = vpack.c.b16 %v302, %v301
    %v383 = vpack.c.b16 %v304, %v303
    %v384 = vpack.c.b16 %v306, %v305
    %v385 = vpack.c.b16 %v308, %v307
    %v386 = vpack.c.b16 %v310, %v309
    %v387 = vpack.c.b16 %v312, %v311
    %v388 = vpack.c.b16 %v314, %v313
    %v389 = vpack.c.b16 %v316, %v315
    %v390 = vpack.c.b16 %v318, %v317
    %v391 = vpack.c.b16 %v320, %v319
    %v392 = vpack.c.b16 %v322, %v321
    %v393 = vpack.c.b16 %v324, %v323
    %v394 = vpack.c.b16 %v326, %v325
    %v395 = vpack.c.b16 %v328, %v327
    %v396 = vpack.c.b16 %v330, %v329
    %v397 = vpack.c.b16 %v332, %v331
    %v398 = vpack.c.b16 %v334, %v333
    %v399 = vpack.c.b16 %v336, %v335
    %v400 = vpack.c.b16 %v338, %v337
    %v401 = vpack.c.b16 %v340, %v339
    %v402 = vpack.c.b16 %v342, %v341
    %v403 = vpack.c.b16 %v344, %v343
    %v404 = vpack.c.b16 %v346, %v345
    %v405 = vpack.c.b16 %v348, %v347
    %v406 = vpack.c.b16 %v350, %v349
    %v407 = vpack.c.b16 %v352, %v351
    %v408 = vpack.c.b16 %v354, %v353
    %v409 = vpack.c.b16 %v356, %v355
    %v410 = vpack.c.b16 %v358, %v357
    %v411 = vpack.c.b16 %v360, %v359
    %v412 = vpack.c.b16 %v362, %v361
    %v413 = vpack.c.b16 %v364, %v363
    %v414 = vpack.c.b16 %v366, %v365
    %463 = vmatprep.subr.bf16.mxu0 0
    %464 = vmatpush1.bf16.msra.mxu0 %v367
    %465 = vmatprep.subr.bf16.mxu0 0
    %466 = vmatpush1.bf16.msra.mxu0 %v368
    %467 = vmatprep.subr.bf16.mxu0 0
    %468 = vmatpush1.bf16.msra.mxu0 %v369
    %469 = vmatprep.subr.bf16.mxu0 0
    %470 = vmatpush1.bf16.msra.mxu0 %v370
    %471 = vmatprep.subr.bf16.mxu0 0
    %472 = vmatpush1.bf16.msra.mxu0 %v371
    %473 = vmatprep.subr.bf16.mxu0 0
    %474 = vmatpush1.bf16.msra.mxu0 %v372
    %475 = vmatprep.subr.bf16.mxu0 0
    %476 = vmatpush1.bf16.msra.mxu0 %v373
    %477 = vmatprep.subr.bf16.mxu0 0
    %478 = vmatpush1.bf16.msra.mxu0 %v374
    %479 = vmatprep.subr.bf16.mxu0 0
    %480 = vmatpush1.bf16.msra.mxu0 %v375
    %481 = vmatprep.subr.bf16.mxu0 0
    %482 = vmatpush1.bf16.msra.mxu0 %v376
    %483 = vmatprep.subr.bf16.mxu0 0
    %484 = vmatpush1.bf16.msra.mxu0 %v377
    %485 = vmatprep.subr.bf16.mxu0 0
    %486 = vmatpush1.bf16.msra.mxu0 %v378
    %487 = vmatprep.subr.bf16.mxu0 0
    %488 = vmatpush1.bf16.msra.mxu0 %v379
    %489 = vmatprep.subr.bf16.mxu0 0
    %490 = vmatpush1.bf16.msra.mxu0 %v380
    %491 = vmatprep.subr.bf16.mxu0 0
    %492 = vmatpush1.bf16.msra.mxu0 %v381
    %493 = vmatprep.subr.bf16.mxu0 0
    %494 = vmatpush1.bf16.msra.mxu0 %v382
    %495 = vmatprep.mubr.bf16.mxu0 %v164
    %496 = vmatmul.mubr.bf16.gmra.mrb[0].mxu0 %v163
    %v497 = vpop.f32.mrb[0].mxu0
    %v498 = vadd.f32 0.0, %v497
    %v499 = vpop.f32.mrb[0].mxu0
    %v500 = vpop.f32.mrb[0].mxu0
    %v501 = vpop.f32.mrb[0].mxu0
    %502 = vdwg.mxu0
    %503 = vmatprep.subr.bf16.mxu0 0
    %504 = vmatpush1.bf16.msra.mxu0 %v383
    %505 = vmatprep.subr.bf16.mxu0 0
    %506 = vmatpush1.bf16.msra.mxu0 %v384
    %507 = vmatprep.subr.bf16.mxu0 0
    %508 = vmatpush1.bf16.msra.mxu0 %v385
    %509 = vmatprep.subr.bf16.mxu0 0
    %510 = vmatpush1.bf16.msra.mxu0 %v386
    %511 = vmatprep.subr.bf16.mxu0 0
    %512 = vmatpush1.bf16.msra.mxu0 %v387
    %513 = vmatprep.subr.bf16.mxu0 0
    %514 = vmatpush1.bf16.msra.mxu0 %v388
    %515 = vmatprep.subr.bf16.mxu0 0
    %516 = vmatpush1.bf16.msra.mxu0 %v389
    %517 = vmatprep.subr.bf16.mxu0 0
    %518 = vmatpush1.bf16.msra.mxu0 %v390
    %519 = vmatprep.subr.bf16.mxu0 0
    %520 = vmatpush1.bf16.msra.mxu0 %v391
    %521 = vmatprep.subr.bf16.mxu0 0
    %522 = vmatpush1.bf16.msra.mxu0 %v392
    %523 = vmatprep.subr.bf16.mxu0 0
    %524 = vmatpush1.bf16.msra.mxu0 %v393
    %525 = vmatprep.subr.bf16.mxu0 0
    %526 = vmatpush1.bf16.msra.mxu0 %v394
    %527 = vmatprep.subr.bf16.mxu0 0
    %528 = vmatpush1.bf16.msra.mxu0 %v395
    %529 = vmatprep.subr.bf16.mxu0 0
    %530 = vmatpush1.bf16.msra.mxu0 %v396
    %531 = vmatprep.subr.bf16.mxu0 0
    %532 = vmatpush1.bf16.msra.mxu0 %v397
    %533 = vmatprep.subr.bf16.mxu0 0
    %534 = vmatpush1.bf16.msra.mxu0 %v398
    %535 = vmatprep.mubr.bf16.mxu0 %v166
    %536 = vmatmul.mubr.bf16.gmra.mrb[0].mxu0 %v165
    %v537 = vpop.f32.mrb[0].mxu0
    %v538 = vadd.f32 %v498, %v537
    %v539 = vpop.f32.mrb[0].mxu0
    %v540 = vpop.f32.mrb[0].mxu0
    %v541 = vpop.f32.mrb[0].mxu0
    %542 = vdwg.mxu0
    %543 = vmatprep.subr.bf16.mxu0 0
    %544 = vmatpush1.bf16.msra.mxu0 %v399
    %545 = vmatprep.subr.bf16.mxu0 0
    %546 = vmatpush1.bf16.msra.mxu0 %v400
    %547 = vmatprep.subr.bf16.mxu0 0
    %548 = vmatpush1.bf16.msra.mxu0 %v401
    %549 = vmatprep.subr.bf16.mxu0 0
    %550 = vmatpush1.bf16.msra.mxu0 %v402
    %551 = vmatprep.subr.bf16.mxu0 0
    %552 = vmatpush1.bf16.msra.mxu0 %v403
    %553 = vmatprep.subr.bf16.mxu0 0
    %554 = vmatpush1.bf16.msra.mxu0 %v404
    %555 = vmatprep.subr.bf16.mxu0 0
    %556 = vmatpush1.bf16.msra.mxu0 %v405
    %557 = vmatprep.subr.bf16.mxu0 0
    %558 = vmatpush1.bf16.msra.mxu0 %v406
    %559 = vmatprep.subr.bf16.mxu0 0
    %560 = vmatpush1.bf16.msra.mxu0 %v407
    %561 = vmatprep.subr.bf16.mxu0 0
    %562 = vmatpush1.bf16.msra.mxu0 %v408
    %563 = vmatprep.subr.bf16.mxu0 0
    %564 = vmatpush1.bf16.msra.mxu0 %v409
    %565 = vmatprep.subr.bf16.mxu0 0
    %566 = vmatpush1.bf16.msra.mxu0 %v410
    %567 = vmatprep.subr.bf16.mxu0 0
    %568 = vmatpush1.bf16.msra.mxu0 %v411
    %569 = vmatprep.subr.bf16.mxu0 0
    %570 = vmatpush1.bf16.msra.mxu0 %v412
    %571 = vmatprep.subr.bf16.mxu0 0
    %572 = vmatpush1.bf16.msra.mxu0 %v413
    %573 = vmatprep.subr.bf16.mxu0 0
    %574 = vmatpush1.bf16.msra.mxu0 %v414
    %575 = vmatprep.mubr.bf16.mxu0 %v168
    %576 = vmatmul.mubr.bf16.gmra.mrb[0].mxu0 %v167
    %v577 = vpop.f32.mrb[0].mxu0
    %v578 = vadd.f32 %v538, %v577
    %v579 = vpop.f32.mrb[0].mxu0
    %v580 = vpop.f32.mrb[0].mxu0
    %v581 = vpop.f32.mrb[0].mxu0
    %582 = vdwg.mxu0
    %v584 = vunpack.c.l.b16 %v22
    %v585 = vunpack.c.h.b16 %v22
    %v586 = vpack.c.b16 %v584, %v584
    %v587 = vpack.c.b16 %v585, %v585
    %v622 = vunpack.c.l.b16 %v23
    %v623 = vunpack.c.l.b16 %v24
    %v624 = vunpack.c.l.b16 %v25
    %v625 = vunpack.c.l.b16 %v26
    %v626 = vunpack.c.l.b16 %v27
    %v627 = vunpack.c.l.b16 %v28
    %v628 = vunpack.c.l.b16 %v29
    %v629 = vunpack.c.l.b16 %v30
    %v630 = vunpack.c.l.b16 %v31
    %v631 = vunpack.c.l.b16 %v32
    %v632 = vunpack.c.l.b16 %v33
    %v633 = vunpack.c.l.b16 %v34
    %v634 = vunpack.c.l.b16 %v35
    %v635 = vunpack.c.l.b16 %v36
    %v636 = vunpack.c.l.b16 %v37
    %v637 = vunpack.c.l.b16 %v38
    %v638 = vunpack.c.l.b16 %v39
    %v639 = vunpack.c.l.b16 %v40
    %v640 = vunpack.c.l.b16 %v41
    %v641 = vunpack.c.l.b16 %v42
    %v642 = vunpack.c.l.b16 %v43
    %v643 = vunpack.c.l.b16 %v44
    %v644 = vunpack.c.l.b16 %v45
    %v645 = vunpack.c.l.b16 %v46
    %v646 = vunpack.c.l.b16 %v47
    %v647 = vunpack.c.l.b16 %v48
    %v648 = vunpack.c.l.b16 %v49
    %v649 = vunpack.c.l.b16 %v50
    %v650 = vunpack.c.l.b16 %v51
    %v651 = vunpack.c.l.b16 %v52
    %v652 = vunpack.c.l.b16 %v53
    %v653 = vunpack.c.l.b16 %v54
    %v654 = vpack.c.b16 %v623, %v622
    %v655 = vpack.c.b16 %v625, %v624
    %v656 = vpack.c.b16 %v627, %v626
    %v657 = vpack.c.b16 %v629, %v628
    %v658 = vpack.c.b16 %v631, %v630
    %v659 = vpack.c.b16 %v633, %v632
    %v660 = vpack.c.b16 %v635, %v634
    %v661 = vpack.c.b16 %v637, %v636
    %v662 = vpack.c.b16 %v639, %v638
    %v663 = vpack.c.b16 %v641, %v640
    %v664 = vpack.c.b16 %v643, %v642
    %v665 = vpack.c.b16 %v645, %v644
    %v666 = vpack.c.b16 %v647, %v646
    %v667 = vpack.c.b16 %v649, %v648
    %v668 = vpack.c.b16 %v651, %v650
    %v669 = vpack.c.b16 %v653, %v652
    %686 = vmatprep.subr.bf16.mxu0 0
    %687 = vmatpush1.bf16.msra.mxu0 %v654
    %688 = vmatprep.subr.bf16.mxu0 0
    %689 = vmatpush1.bf16.msra.mxu0 %v655
    %690 = vmatprep.subr.bf16.mxu0 0
    %691 = vmatpush1.bf16.msra.mxu0 %v656
    %692 = vmatprep.subr.bf16.mxu0 0
    %693 = vmatpush1.bf16.msra.mxu0 %v657
    %694 = vmatprep.subr.bf16.mxu0 0
    %695 = vmatpush1.bf16.msra.mxu0 %v658
    %696 = vmatprep.subr.bf16.mxu0 0
    %697 = vmatpush1.bf16.msra.mxu0 %v659
    %698 = vmatprep.subr.bf16.mxu0 0
    %699 = vmatpush1.bf16.msra.mxu0 %v660
    %700 = vmatprep.subr.bf16.mxu0 0
    %701 = vmatpush1.bf16.msra.mxu0 %v661
    %702 = vmatprep.subr.bf16.mxu0 0
    %703 = vmatpush1.bf16.msra.mxu0 %v662
    %704 = vmatprep.subr.bf16.mxu0 0
    %705 = vmatpush1.bf16.msra.mxu0 %v663
    %706 = vmatprep.subr.bf16.mxu0 0
    %707 = vmatpush1.bf16.msra.mxu0 %v664
    %708 = vmatprep.subr.bf16.mxu0 0
    %709 = vmatpush1.bf16.msra.mxu0 %v665
    %710 = vmatprep.subr.bf16.mxu0 0
    %711 = vmatpush1.bf16.msra.mxu0 %v666
    %712 = vmatprep.subr.bf16.mxu0 0
    %713 = vmatpush1.bf16.msra.mxu0 %v667
    %714 = vmatprep.subr.bf16.mxu0 0
    %715 = vmatpush1.bf16.msra.mxu0 %v668
    %716 = vmatprep.subr.bf16.mxu0 0
    %717 = vmatpush1.bf16.msra.mxu0 %v669
    %718 = vmatprep.mubr.bf16.mxu0 %v587
    %719 = vmatmul.mubr.bf16.gmra.mrb[0].mxu0 %v586
    %v720 = vpop.f32.mrb[0].mxu0
    %v721 = vadd.f32 %v578, %v720
    %v722 = vpop.f32.mrb[0].mxu0
    %v723 = vpop.f32.mrb[0].mxu0
    %v724 = vpop.f32.mrb[0].mxu0
    %725 = vdwg.mxu0
    %v726 = vld [vmem:[%s2] sm:$0xf]
    %v727 = vld [vmem:[%s3 + $0x200] sm:$0xf]
    %v728 = vld [vmem:[%s3 + $0x204] sm:$0xf]
    %v729 = vld [vmem:[%s3 + $0x208] sm:$0xf]
    %v730 = vld [vmem:[%s3 + $0x20c] sm:$0xf]
    %v731 = vld [vmem:[%s3 + $0x210] sm:$0xf]
    %v732 = vld [vmem:[%s3 + $0x214] sm:$0xf]
    %v733 = vld [vmem:[%s3 + $0x218] sm:$0xf]
    %v734 = vld [vmem:[%s3 + $0x21c] sm:$0xf]
    %v735 = vld [vmem:[%s3 + $0x220] sm:$0xf]
    %v736 = vld [vmem:[%s3 + $0x224] sm:$0xf]
    %v737 = vld [vmem:[%s3 + $0x228] sm:$0xf]
    %v738 = vld [vmem:[%s3 + $0x22c] sm:$0xf]
    %v739 = vld [vmem:[%s3 + $0x230] sm:$0xf]
    %v740 = vld [vmem:[%s3 + $0x234] sm:$0xf]
    %v741 = vld [vmem:[%s3 + $0x238] sm:$0xf]
    %v742 = vld [vmem:[%s3 + $0x23c] sm:$0xf]
    %v759 = vunpack.c.l.b16 %v727
    %v760 = vunpack.c.l.b16 %v728
    %v761 = vunpack.c.l.b16 %v729
    %v762 = vunpack.c.l.b16 %v730
    %v763 = vunpack.c.l.b16 %v731
    %v764 = vunpack.c.l.b16 %v732
    %v765 = vunpack.c.l.b16 %v733
    %v766 = vunpack.c.l.b16 %v734
    %v767 = vunpack.c.l.b16 %v735
    %v768 = vunpack.c.l.b16 %v736
    %v769 = vunpack.c.l.b16 %v737
    %v770 = vunpack.c.l.b16 %v738
    %v771 = vunpack.c.l.b16 %v739
    %v772 = vunpack.c.l.b16 %v740
    %v773 = vunpack.c.l.b16 %v741
    %v774 = vunpack.c.l.b16 %v742
    %v775 = vpack.c.b16 %v760, %v759
    %v776 = vpack.c.b16 %v762, %v761
    %v777 = vpack.c.b16 %v764, %v763
    %v778 = vpack.c.b16 %v766, %v765
    %v779 = vpack.c.b16 %v768, %v767
    %v780 = vpack.c.b16 %v770, %v769
    %v781 = vpack.c.b16 %v772, %v771
    %v782 = vpack.c.b16 %v774, %v773
    %791 = vmatprep.subr.bf16.mxu0 0
    %792 = vmatpush1.bf16.msra.mxu0 %v775
    %793 = vmatprep.subr.bf16.mxu0 0
    %794 = vmatpush1.bf16.msra.mxu0 %v776
    %795 = vmatprep.subr.bf16.mxu0 0
    %796 = vmatpush1.bf16.msra.mxu0 %v777
    %797 = vmatprep.subr.bf16.mxu0 0
    %798 = vmatpush1.bf16.msra.mxu0 %v778
    %799 = vmatprep.subr.bf16.mxu0 0
    %800 = vmatpush1.bf16.msra.mxu0 %v779
    %801 = vmatprep.subr.bf16.mxu0 0
    %802 = vmatpush1.bf16.msra.mxu0 %v780
    %803 = vmatprep.subr.bf16.mxu0 0
    %804 = vmatpush1.bf16.msra.mxu0 %v781
    %805 = vmatprep.subr.bf16.mxu0 0
    %806 = vmatpush1.bf16.msra.mxu0 %v782
    %807 = vmatprep.subr.bf16.mxu0 0
    %808 = vmatpush1.bf16.msra.mxu0 0
    %809 = vmatprep.subr.bf16.mxu0 0
    %810 = vmatpush1.bf16.msra.mxu0 0
    %811 = vmatprep.subr.bf16.mxu0 0
    %812 = vmatpush1.bf16.msra.mxu0 0
    %813 = vmatprep.subr.bf16.mxu0 0
    %814 = vmatpush1.bf16.msra.mxu0 0
    %815 = vmatprep.subr.bf16.mxu0 0
    %816 = vmatpush1.bf16.msra.mxu0 0
    %817 = vmatprep.subr.bf16.mxu0 0
    %818 = vmatpush1.bf16.msra.mxu0 0
    %819 = vmatprep.subr.bf16.mxu0 0
    %820 = vmatpush1.bf16.msra.mxu0 0
    %821 = vmatprep.subr.bf16.mxu0 0
    %822 = vmatpush1.bf16.msra.mxu0 0
    %823 = vmatprep.mubr.bf16.mxu0 0
    %824 = vmatmul.mubr.bf16.gmra.mrb[0].mxu0 %v726
    %v825 = vpop.f32.mrb[0].mxu0
    %v826 = vadd.f32 0.0, %v825
    %v827 = vpop.f32.mrb[0].mxu0
    %v828 = vpop.f32.mrb[0].mxu0
    %v829 = vpop.f32.mrb[0].mxu0
    %830 = vdwg.mxu0
    %v831 = vadd.f32 %v721, %v826
    %v832 = vld [vmem:[%s4] sm:$0x1]
    %v834 = vlaneseq
    %v835 = vshrl.u32 %v834, 7
    %v836 = vsub.s32 0, %v835
    %v837 = vrot.slane %v832, %v836
    %v839 = vadd.f32 %v831, %v837
    %840 = vst [vmem:[#allocation2] sm:$0xff] %v839
    // Predicated region
    $region22: #{combined_model_forward.1} parent=1 // pred_check
      _
    $region23: #{combined_model_forward.1} parent=1 // pred_check_branch
      %842 = sbr.rel (0) target = $region25
    $region24: #{combined_model_forward.1} parent=1 // pred_region
      %s844 = ssub.s32 128, 128
      %845 = vsyncadd [#allocation3], %s844
      %s847 = sshll.u32 [#allocation2], 4
      %s848 = int_to_ptr.vmem [resolvable:$true] %s847
      %850 = dma.vmem_to_hbm [thread:$0]  %s848, 128, %s5, [#allocation3]
    $region25: #{combined_model_forward.1} parent=1 // pred_fallthru
      _
    // Predicated region
    $region26: #{combined_model_forward.1} parent=1 // pred_check
      _
    $region27: #{combined_model_forward.1} parent=1 // pred_check_branch
      %852 = sbr.rel (0) target = $region29
    $region28: #{combined_model_forward.1} parent=1 // pred_region
      %853 = dma.done [#allocation3], 128
    $region29: #{combined_model_forward.1} parent=1 // pred_fallthru
      _
    %854 = vsyncpa [#allocation3], 1

</llo_original>
